<compile_context>
chip_gen: v7x
topology: tpu7x:2x2x1
jax: 0.10.0
libtpu: 0.0.40
codegen_flags: <defaults>
</compile_context>

<pallas_src>
import functools

import jax
import jax.numpy as jnp
from jax.experimental import pallas as pl
from jax.experimental.pallas import tpu as pltpu


# ----------------------------------------------------------------------------
# Fused Pallas kernel: out = (relu(relu(x@w1+b1)@w2+b2))@w3 + b3
# ----------------------------------------------------------------------------
def _fused_mlp_kernel(x_ref, w1_ref, b1_ref, w2_ref, b2_ref, w3_ref, b3_ref,
                      o_ref):
    x = x_ref[...]
    h = jnp.dot(x, w1_ref[...], preferred_element_type=jnp.float32) + b1_ref[...]
    h = jnp.maximum(h, 0.0)
    h = jnp.dot(h, w2_ref[...], preferred_element_type=jnp.float32) + b2_ref[...]
    h = jnp.maximum(h, 0.0)
    out = jnp.dot(h, w3_ref[...], preferred_element_type=jnp.float32) + b3_ref[...]
    o_ref[...] = out.astype(o_ref.dtype)


def metadata_forward(params, x, *, block_m=256):
    """x: (B, 20) float32 -> (B, n_outputs) float32, fully fused in one kernel."""
    w1, b1 = params["w1"], params["b1"]
    w2, b2 = params["w2"], params["b2"]
    w3, b3 = params["w3"], params["b3"]

    B, K = x.shape
    H = w1.shape[1]
    n_out = w3.shape[1]

    # Tile the batch dim only when it is big enough to matter; a single
    # full-array block otherwise (block dims equal to array dims are always
    # legal, so no explicit padding / post-slicing is needed).
    if B <= block_m:
        tm = B
    else:
        tm = block_m                      # multiple of 8 -> valid sublane tile
    grid_m = pl.cdiv(B, tm)

    return pl.pallas_call(
        _fused_mlp_kernel,
        out_shape=jax.ShapeDtypeStruct((B, n_out), jnp.float32),
        grid=(grid_m,),
        in_specs=[
            pl.BlockSpec((tm, K), lambda i: (i, 0)),      # x tile (rows)
            pl.BlockSpec((K, H), lambda i: (0, 0)),       # w1 (resident)
            pl.BlockSpec((1, H), lambda i: (0, 0)),       # b1
            pl.BlockSpec((H, H), lambda i: (0, 0)),       # w2
            pl.BlockSpec((1, H), lambda i: (0, 0)),       # b2
            pl.BlockSpec((H, n_out), lambda i: (0, 0)),   # w3
            pl.BlockSpec((1, n_out), lambda i: (0, 0)),   # b3
        ],
        out_specs=pl.BlockSpec((tm, n_out), lambda i: (i, 0)),
        compiler_params=pltpu.CompilerParams(
            dimension_semantics=("parallel",)),           # shards M on v7x
    )(x, w1, b1, w2, b2, w3, b3)


# ----------------------------------------------------------------------------
# Parameters (PyTorch nn.Linear default init, laid out once for the kernel)
# ----------------------------------------------------------------------------
def init_params(hidden_sz, n_outputs, key):
    def uniform(k, shape, fan_in):
        bound = 1.0 / jnp.sqrt(jnp.float32(fan_in))
        return jax.random.uniform(k, shape, jnp.float32, -bound, bound)

    keys = jax.random.split(key, 6)
    # weights stored (in, out) == PyTorch weight.T ; biases stored (1, out)
    return {
        "w1": uniform(keys[0], (20, hidden_sz), 20),
        "b1": uniform(keys[1], (1, hidden_sz), 20),
        "w2": uniform(keys[2], (hidden_sz, hidden_sz), hidden_sz),
        "b2": uniform(keys[3], (1, hidden_sz), hidden_sz),
        "w3": uniform(keys[4], (hidden_sz, n_outputs), hidden_sz),
        "b3": uniform(keys[5], (1, n_outputs), hidden_sz),
    }


# Pure-JAX reference (correctness check of the fused Pallas path)
def reference_forward(params, x):
    h = jnp.maximum(x @ params["w1"] + params["b1"], 0.0)
    h = jnp.maximum(h @ params["w2"] + params["b2"], 0.0)
    return h @ params["w3"] + params["b3"]


if __name__ == "__main__":
    hidden_sz = 32
    n_outputs = 16
    batch = 2

    key = jax.random.PRNGKey(0)
    k_param, k_x = jax.random.split(key)

    params = init_params(hidden_sz, n_outputs, k_param)
    x = jax.random.normal(k_x, (batch, 20), dtype=jnp.float32)

    fwd = jax.jit(metadata_forward)
    out = jax.block_until_ready(fwd(params, x))
    assert out.shape == (batch, n_outputs), out.shape

    ref = jax.block_until_ready(reference_forward(params, x))
    assert jnp.allclose(out, ref, rtol=1e-5, atol=1e-5), "mismatch vs reference"

    print("KERNEL_OK")
</pallas_src>

<mosaic_0001>
module attributes {stable_mosaic.version = 11 : i64} {
  func.func @_fused_mlp_kernel(%arg0: i32, %arg1: memref<2x20xf32, #tpu.memory_space<vmem>>, %arg2: memref<20x32xf32, #tpu.memory_space<vmem>>, %arg3: memref<1x32xf32, #tpu.memory_space<vmem>>, %arg4: memref<32x32xf32, #tpu.memory_space<vmem>>, %arg5: memref<1x32xf32, #tpu.memory_space<vmem>>, %arg6: memref<32x16xf32, #tpu.memory_space<vmem>>, %arg7: memref<1x16xf32, #tpu.memory_space<vmem>>, %arg8: memref<2x16xf32, #tpu.memory_space<vmem>>) attributes {dimension_semantics = [#tpu.dimension_semantics<parallel>], iteration_bounds = array<i64: 1>, scalar_prefetch = 0 : i64, scratch_operands = 0 : i64, tpu.core_type = #tpu.core_type<tc>, window_params = [{transform_indices = @transform_0, window_bounds = array<i64: 2, 20>}, {pipeline_mode = #tpu.pipeline_mode<synchronous>, transform_indices = @transform_1, window_bounds = array<i64: 20, 32>}, {pipeline_mode = #tpu.pipeline_mode<synchronous>, transform_indices = @transform_2, window_bounds = array<i64: 1, 32>}, {pipeline_mode = #tpu.pipeline_mode<synchronous>, transform_indices = @transform_3, window_bounds = array<i64: 32, 32>}, {pipeline_mode = #tpu.pipeline_mode<synchronous>, transform_indices = @transform_4, window_bounds = array<i64: 1, 32>}, {pipeline_mode = #tpu.pipeline_mode<synchronous>, transform_indices = @transform_5, window_bounds = array<i64: 32, 16>}, {pipeline_mode = #tpu.pipeline_mode<synchronous>, transform_indices = @transform_6, window_bounds = array<i64: 1, 16>}, {transform_indices = @transform_7, window_bounds = array<i64: 2, 16>}]} {
    %c0 = arith.constant 0 : index
    %c0_0 = arith.constant 0 : index
    %0 = vector.load %arg1[%c0, %c0_0] : memref<2x20xf32, #tpu.memory_space<vmem>>, vector<2x20xf32>
    %c0_1 = arith.constant 0 : index
    %c0_2 = arith.constant 0 : index
    %1 = vector.load %arg2[%c0_1, %c0_2] : memref<20x32xf32, #tpu.memory_space<vmem>>, vector<20x32xf32>
    %cst = arith.constant dense<0.000000e+00> : vector<2x32xf32>
    %2 = tpu.matmul %0, %1, %cst {dimension_numbers = #tpu.dot_dimension_numbers<[1], [0], [0], [1], [0, 0, 1, 1], [], []>} : vector<2x20xf32>, vector<20x32xf32>, vector<2x32xf32> -> vector<2x32xf32>
    %c0_3 = arith.constant 0 : index
    %c0_4 = arith.constant 0 : index
    %3 = vector.load %arg3[%c0_3, %c0_4] : memref<1x32xf32, #tpu.memory_space<vmem>>, vector<1x32xf32>
    %4 = vector.broadcast %3 : vector<1x32xf32> to vector<2x32xf32>
    %5 = arith.addf %2, %4 : vector<2x32xf32>
    %cst_5 = arith.constant 0.000000e+00 : f32
    %6 = vector.broadcast %cst_5 : f32 to vector<2x32xf32>
    %7 = arith.maximumf %5, %6 : vector<2x32xf32>
    %c0_6 = arith.constant 0 : index
    %c0_7 = arith.constant 0 : index
    %8 = vector.load %arg4[%c0_6, %c0_7] : memref<32x32xf32, #tpu.memory_space<vmem>>, vector<32x32xf32>
    %cst_8 = arith.constant dense<0.000000e+00> : vector<2x32xf32>
    %9 = tpu.matmul %7, %8, %cst_8 {dimension_numbers = #tpu.dot_dimension_numbers<[1], [0], [0], [1], [0, 0, 1, 1], [], []>} : vector<2x32xf32>, vector<32x32xf32>, vector<2x32xf32> -> vector<2x32xf32>
    %c0_9 = arith.constant 0 : index
    %c0_10 = arith.constant 0 : index
    %10 = vector.load %arg5[%c0_9, %c0_10] : memref<1x32xf32, #tpu.memory_space<vmem>>, vector<1x32xf32>
    %11 = vector.broadcast %10 : vector<1x32xf32> to vector<2x32xf32>
    %12 = arith.addf %9, %11 : vector<2x32xf32>
    %cst_11 = arith.constant 0.000000e+00 : f32
    %13 = vector.broadcast %cst_11 : f32 to vector<2x32xf32>
    %14 = arith.maximumf %12, %13 : vector<2x32xf32>
    %c0_12 = arith.constant 0 : index
    %c0_13 = arith.constant 0 : index
    %15 = vector.load %arg6[%c0_12, %c0_13] : memref<32x16xf32, #tpu.memory_space<vmem>>, vector<32x16xf32>
    %cst_14 = arith.constant dense<0.000000e+00> : vector<2x16xf32>
    %16 = tpu.matmul %14, %15, %cst_14 {dimension_numbers = #tpu.dot_dimension_numbers<[1], [0], [0], [1], [0, 0, 1, 1], [], []>} : vector<2x32xf32>, vector<32x16xf32>, vector<2x16xf32> -> vector<2x16xf32>
    %c0_15 = arith.constant 0 : index
    %c0_16 = arith.constant 0 : index
    %17 = vector.load %arg7[%c0_15, %c0_16] : memref<1x16xf32, #tpu.memory_space<vmem>>, vector<1x16xf32>
    %18 = vector.broadcast %17 : vector<1x16xf32> to vector<2x16xf32>
    %19 = arith.addf %16, %18 : vector<2x16xf32>
    %c0_17 = arith.constant 0 : index
    %c0_18 = arith.constant 0 : index
    %20 = vector.load %arg8[%c0_17, %c0_18] : memref<2x16xf32, #tpu.memory_space<vmem>>, vector<2x16xf32>
    tpu.vector_store %arg8[%c0_17, %c0_18], %19 {strides = array<i32>} : memref<2x16xf32, #tpu.memory_space<vmem>>, vector<2x16xf32>,
    return
  }
  func.func @transform_0(%arg0: i32) -> (i32, i32) {
    %c0_i32 = arith.constant 0 : i32
    %c0_i32_0 = arith.constant 0 : i32
    return %arg0, %c0_i32 : i32, i32
  }
  func.func @transform_1(%arg0: i32) -> (i32, i32) {
    %c0_i32 = arith.constant 0 : i32
    %c0_i32_0 = arith.constant 0 : i32
    %c0_i32_1 = arith.constant 0 : i32
    return %c0_i32, %c0_i32_0 : i32, i32
  }
  func.func @transform_2(%arg0: i32) -> (i32, i32) {
    %c0_i32 = arith.constant 0 : i32
    %c0_i32_0 = arith.constant 0 : i32
    %c0_i32_1 = arith.constant 0 : i32
    return %c0_i32, %c0_i32_0 : i32, i32
  }
  func.func @transform_3(%arg0: i32) -> (i32, i32) {
    %c0_i32 = arith.constant 0 : i32
    %c0_i32_0 = arith.constant 0 : i32
    %c0_i32_1 = arith.constant 0 : i32
    return %c0_i32, %c0_i32_0 : i32, i32
  }
  func.func @transform_4(%arg0: i32) -> (i32, i32) {
    %c0_i32 = arith.constant 0 : i32
    %c0_i32_0 = arith.constant 0 : i32
    %c0_i32_1 = arith.constant 0 : i32
    return %c0_i32, %c0_i32_0 : i32, i32
  }
  func.func @transform_5(%arg0: i32) -> (i32, i32) {
    %c0_i32 = arith.constant 0 : i32
    %c0_i32_0 = arith.constant 0 : i32
    %c0_i32_1 = arith.constant 0 : i32
    return %c0_i32, %c0_i32_0 : i32, i32
  }
  func.func @transform_6(%arg0: i32) -> (i32, i32) {
    %c0_i32 = arith.constant 0 : i32
    %c0_i32_0 = arith.constant 0 : i32
    %c0_i32_1 = arith.constant 0 : i32
    return %c0_i32, %c0_i32_0 : i32, i32
  }
  func.func @transform_7(%arg0: i32) -> (i32, i32) {
    %c0_i32 = arith.constant 0 : i32
    %c0_i32_0 = arith.constant 0 : i32
    return %arg0, %c0_i32 : i32, i32
  }
}

</mosaic_0001>

<llo_original>
// kernel: metadata_forward.1
$region0: #{metadata_forward.1}
  #allocation0 [shape = 'u32[]', space=smem, size = 0x4, offset = 0x4, fixed_abs, tag = 'smem constant byte address 0x4 - core index']
  #allocation1 [shape = 'u32[144,128]{1,0:T(1,128)}', space=vmem, size = 0x12000, scoped, tag = 'internal scratch']
  %s0 = inlined_call_operand.vmem [shape: f32[2,20], index: 0, kind: input, shape index: {}]
  %s1 = inlined_call_operand.vmem [shape: f32[20,32], index: 1, kind: input, shape index: {}]
  %s2 = inlined_call_operand.vmem [shape: f32[1,32], index: 2, kind: input, shape index: {}]
  %s3 = inlined_call_operand.vmem [shape: f32[32,32], index: 3, kind: input, shape index: {}]
  %s4 = inlined_call_operand.vmem [shape: f32[1,32], index: 4, kind: input, shape index: {}]
  %s5 = inlined_call_operand.vmem [shape: f32[32,16], index: 5, kind: input, shape index: {}]
  %s6 = inlined_call_operand.vmem [shape: f32[1,16], index: 6, kind: input, shape index: {}]
  %s7 = inlined_call_operand.hbm [shape: f32[2,16], index: 7, kind: output, shape index: {}]
  %s8 = sld [smem:[#allocation0]]
  $region38: #{metadata_forward.1} parent=0
    _
  %s10 = ssub.s32 1, %s8
  %s11 = scalar_select 0, %s10, %s8
  $region1: #{metadata_forward.1} parent=0
    #allocation2 [shape = 'u8[1024]{0}', space=vmem, size = 0x400, scoped, tag = 'output window, operand 0, single buffered']
    #allocation3 [shape = 's32[1]{0}', space=sflag, size = 0x4, scoped, tag = 'scoped memory for metadata_forward.1']
    %12 = vsyncpa [#allocation3], 0
    // Predicated region
    $region2: #{metadata_forward.1} parent=1 // pred_check
      _
    $region3: #{metadata_forward.1} parent=1 // pred_check_branch
      %14 = sbr.rel (0) target = $region5
    $region4: #{metadata_forward.1} parent=1 // pred_region
      _
    $region5: #{metadata_forward.1} parent=1 // pred_fallthru
      _
    // Predicated region
    $region6: #{metadata_forward.1} parent=1 // pred_check
      _
    $region7: #{metadata_forward.1} parent=1 // pred_check_branch
      %16 = sbr.rel (0) target = $region9
    $region8: #{metadata_forward.1} parent=1 // pred_region
      _
    $region9: #{metadata_forward.1} parent=1 // pred_fallthru
      _
    // Predicated region
    $region10: #{metadata_forward.1} parent=1 // pred_check
      _
    $region11: #{metadata_forward.1} parent=1 // pred_check_branch
      %18 = sbr.rel (0) target = $region13
    $region12: #{metadata_forward.1} parent=1 // pred_region
      _
    $region13: #{metadata_forward.1} parent=1 // pred_fallthru
      _
    // Predicated region
    $region14: #{metadata_forward.1} parent=1 // pred_check
      _
    $region15: #{metadata_forward.1} parent=1 // pred_check_branch
      %20 = sbr.rel (0) target = $region17
    $region16: #{metadata_forward.1} parent=1 // pred_region
      _
    $region17: #{metadata_forward.1} parent=1 // pred_fallthru
      _
    // Predicated region
    $region18: #{metadata_forward.1} parent=1 // pred_check
      _
    $region19: #{metadata_forward.1} parent=1 // pred_check_branch
      %22 = sbr.rel (0) target = $region21
    $region20: #{metadata_forward.1} parent=1 // pred_region
      _
    $region21: #{metadata_forward.1} parent=1 // pred_fallthru
      _
    // Predicated region
    $region22: #{metadata_forward.1} parent=1 // pred_check
      _
    $region23: #{metadata_forward.1} parent=1 // pred_check_branch
      %24 = sbr.rel (0) target = $region25
    $region24: #{metadata_forward.1} parent=1 // pred_region
      _
    $region25: #{metadata_forward.1} parent=1 // pred_fallthru
      _
    // Predicated region
    $region26: #{metadata_forward.1} parent=1 // pred_check
      _
    $region27: #{metadata_forward.1} parent=1 // pred_check_branch
      %26 = sbr.rel (0) target = $region29
    $region28: #{metadata_forward.1} parent=1 // pred_region
      _
    $region29: #{metadata_forward.1} parent=1 // pred_fallthru
      _
    %v27 = vld [vmem:[%s0] sm:$0x3]
    %v28 = vld [vmem:[%s1] sm:$0xff]
    %v29 = vld [vmem:[%s1 + $0x8] sm:$0xff]
    %v30 = vld [vmem:[%s1 + $0x10] sm:$0xf]
    %v31 = vld [vmem:[%s2] sm:$0x1]
    %v33 = vlaneseq
    %v34 = vshrl.u32 %v33, 7
    %v35 = vsub.s32 0, %v34
    %v36 = vrot.slane %v31, %v35
    %vm38 = vcmask 162816
    %v40 = vsel %vm38, %v27, 0
    %vm42 = vcmask 1043456
    %v44 = vsel %vm42, %v30, 0
    %46 = vmatprep.subr.mxu0 0.0
    %47 = vmatpush1.msra.mxu0 %v28
    %48 = vmatprep.subr.mxu0 0.0
    %49 = vmatpush1.msra.mxu0 %v29
    %50 = vmatprep.subr.mxu0 0.0
    %51 = vmatpush1.msra.mxu0 %v44
    %52 = vmatprep.subr.mxu0 0.0
    %53 = vmatpush1.msra.mxu0 0.0
    %54 = vmatprep.subr.mxu0 0.0
    %55 = vmatpush1.msra.mxu0 0.0
    %56 = vmatprep.subr.mxu0 0.0
    %57 = vmatpush1.msra.mxu0 0.0
    %58 = vmatprep.subr.mxu0 0.0
    %59 = vmatpush1.msra.mxu0 0.0
    %60 = vmatprep.subr.mxu0 0.0
    %61 = vmatpush1.msra.mxu0 0.0
    %62 = vmatprep.subr.mxu0 0.0
    %63 = vmatpush1.msra.mxu0 0.0
    %64 = vmatprep.subr.mxu0 0.0
    %65 = vmatpush1.msra.mxu0 0.0
    %66 = vmatprep.subr.mxu0 0.0
    %67 = vmatpush1.msra.mxu0 0.0
    %68 = vmatprep.subr.mxu0 0.0
    %69 = vmatpush1.msra.mxu0 0.0
    %70 = vmatprep.subr.mxu0 0.0
    %71 = vmatpush1.msra.mxu0 0.0
    %72 = vmatprep.subr.mxu0 0.0
    %73 = vmatpush1.msra.mxu0 0.0
    %74 = vmatprep.subr.mxu0 0.0
    %75 = vmatpush1.msra.mxu0 0.0
    %76 = vmatprep.subr.mxu0 0.0
    %77 = vmatpush1.msra.mxu0 0.0
    %78 = vmatprep.subr.mxu0 0.0
    %79 = vmatpush1.msra.mxu0 0.0
    %80 = vmatprep.subr.mxu0 0.0
    %81 = vmatpush1.msra.mxu0 0.0
    %82 = vmatprep.subr.mxu0 0.0
    %83 = vmatpush1.msra.mxu0 0.0
    %84 = vmatprep.subr.mxu0 0.0
    %85 = vmatpush1.msra.mxu0 0.0
    %86 = vmatprep.subr.mxu0 0.0
    %87 = vmatpush1.msra.mxu0 0.0
    %88 = vmatprep.subr.mxu0 0.0
    %89 = vmatpush1.msra.mxu0 0.0
    %90 = vmatprep.subr.mxu0 0.0
    %91 = vmatpush1.msra.mxu0 0.0
    %92 = vmatprep.subr.mxu0 0.0
    %93 = vmatpush1.msra.mxu0 0.0
    %94 = vmatprep.subr.mxu0 0.0
    %95 = vmatpush1.msra.mxu0 0.0
    %96 = vmatprep.subr.mxu0 0.0
    %97 = vmatpush1.msra.mxu0 0.0
    %98 = vmatprep.subr.mxu0 0.0
    %99 = vmatpush1.msra.mxu0 0.0
    %100 = vmatprep.subr.mxu0 0.0
    %101 = vmatpush1.msra.mxu0 0.0
    %102 = vmatprep.subr.mxu0 0.0
    %103 = vmatpush1.msra.mxu0 0.0
    %104 = vmatprep.subr.mxu0 0.0
    %105 = vmatpush1.msra.mxu0 0.0
    %106 = vmatprep.subr.mxu0 0.0
    %107 = vmatpush1.msra.mxu0 0.0
    %108 = vmatprep.subr.mxu0 0.0
    %109 = vmatpush1.msra.mxu0 0.0
    %110 = vmatprep.mubr.f32.mxu0 0.0
    %111 = vmatmul.mubr.f32.gmra.mrb[0].mxu0 %v40
    %v112 = vpop.f32.mrb[0].mxu0
    %v113 = vadd.f32 %v36, %v112
    %v114 = vpop.f32.mrb[0].mxu0
    %115 = vdwg.mxu0
    %v116 = vmax.f32 %v113, 0.0
    %v117 = vld [vmem:[%s3] sm:$0xff]
    %v118 = vld [vmem:[%s3 + $0x8] sm:$0xff]
    %v119 = vld [vmem:[%s3 + $0x10] sm:$0xff]
    %v120 = vld [vmem:[%s3 + $0x18] sm:$0xff]
    %v121 = vld [vmem:[%s4] sm:$0x1]
    %v123 = vlaneseq
    %v124 = vshrl.u32 %v123, 7
    %v125 = vsub.s32 0, %v124
    %v126 = vrot.slane %v121, %v125
    %vm128 = vcmask 261120
    %v130 = vsel %vm128, %v116, 0
    %132 = vmatprep.subr.mxu0 0.0
    %133 = vmatpush1.msra.mxu0 %v117
    %134 = vmatprep.subr.mxu0 0.0
    %135 = vmatpush1.msra.mxu0 %v118
    %136 = vmatprep.subr.mxu0 0.0
    %137 = vmatpush1.msra.mxu0 %v119
    %138 = vmatprep.subr.mxu0 0.0
    %139 = vmatpush1.msra.mxu0 %v120
    %140 = vmatprep.subr.mxu0 0.0
    %141 = vmatpush1.msra.mxu0 0.0
    %142 = vmatprep.subr.mxu0 0.0
    %143 = vmatpush1.msra.mxu0 0.0
    %144 = vmatprep.subr.mxu0 0.0
    %145 = vmatpush1.msra.mxu0 0.0
    %146 = vmatprep.subr.mxu0 0.0
    %147 = vmatpush1.msra.mxu0 0.0
    %148 = vmatprep.subr.mxu0 0.0
    %149 = vmatpush1.msra.mxu0 0.0
    %150 = vmatprep.subr.mxu0 0.0
    %151 = vmatpush1.msra.mxu0 0.0
    %152 = vmatprep.subr.mxu0 0.0
    %153 = vmatpush1.msra.mxu0 0.0
    %154 = vmatprep.subr.mxu0 0.0
    %155 = vmatpush1.msra.mxu0 0.0
    %156 = vmatprep.subr.mxu0 0.0
    %157 = vmatpush1.msra.mxu0 0.0
    %158 = vmatprep.subr.mxu0 0.0
    %159 = vmatpush1.msra.mxu0 0.0
    %160 = vmatprep.subr.mxu0 0.0
    %161 = vmatpush1.msra.mxu0 0.0
    %162 = vmatprep.subr.mxu0 0.0
    %163 = vmatpush1.msra.mxu0 0.0
    %164 = vmatprep.subr.mxu0 0.0
    %165 = vmatpush1.msra.mxu0 0.0
    %166 = vmatprep.subr.mxu0 0.0
    %167 = vmatpush1.msra.mxu0 0.0
    %168 = vmatprep.subr.mxu0 0.0
    %169 = vmatpush1.msra.mxu0 0.0
    %170 = vmatprep.subr.mxu0 0.0
    %171 = vmatpush1.msra.mxu0 0.0
    %172 = vmatprep.subr.mxu0 0.0
    %173 = vmatpush1.msra.mxu0 0.0
    %174 = vmatprep.subr.mxu0 0.0
    %175 = vmatpush1.msra.mxu0 0.0
    %176 = vmatprep.subr.mxu0 0.0
    %177 = vmatpush1.msra.mxu0 0.0
    %178 = vmatprep.subr.mxu0 0.0
    %179 = vmatpush1.msra.mxu0 0.0
    %180 = vmatprep.subr.mxu0 0.0
    %181 = vmatpush1.msra.mxu0 0.0
    %182 = vmatprep.subr.mxu0 0.0
    %183 = vmatpush1.msra.mxu0 0.0
    %184 = vmatprep.subr.mxu0 0.0
    %185 = vmatpush1.msra.mxu0 0.0
    %186 = vmatprep.subr.mxu0 0.0
    %187 = vmatpush1.msra.mxu0 0.0
    %188 = vmatprep.subr.mxu0 0.0
    %189 = vmatpush1.msra.mxu0 0.0
    %190 = vmatprep.subr.mxu0 0.0
    %191 = vmatpush1.msra.mxu0 0.0
    %192 = vmatprep.subr.mxu0 0.0
    %193 = vmatpush1.msra.mxu0 0.0
    %194 = vmatprep.subr.mxu0 0.0
    %195 = vmatpush1.msra.mxu0 0.0
    %196 = vmatprep.mubr.f32.mxu0 0.0
    %197 = vmatmul.mubr.f32.gmra.mrb[0].mxu0 %v130
    %v198 = vpop.f32.mrb[0].mxu0
    %v199 = vadd.f32 %v126, %v198
    %v200 = vpop.f32.mrb[0].mxu0
    %201 = vdwg.mxu0
    %v202 = vmax.f32 %v199, 0.0
    %v203 = vld [vmem:[%s5] sm:$0xff]
    %v204 = vld [vmem:[%s5 + $0x8] sm:$0xff]
    %v205 = vld [vmem:[%s5 + $0x10] sm:$0xff]
    %v206 = vld [vmem:[%s5 + $0x18] sm:$0xff]
    %v207 = vld [vmem:[%s6] sm:$0x1]
    %v209 = vlaneseq
    %v210 = vshrl.u32 %v209, 7
    %v211 = vsub.s32 0, %v210
    %v212 = vrot.slane %v207, %v211
    %v215 = vsel %vm128, %v202, 0
    %217 = vmatprep.subr.mxu0 0.0
    %218 = vmatpush1.msra.mxu0 %v203
    %219 = vmatprep.subr.mxu0 0.0
    %220 = vmatpush1.msra.mxu0 %v204
    %221 = vmatprep.subr.mxu0 0.0
    %222 = vmatpush1.msra.mxu0 %v205
    %223 = vmatprep.subr.mxu0 0.0
    %224 = vmatpush1.msra.mxu0 %v206
    %225 = vmatprep.subr.mxu0 0.0
    %226 = vmatpush1.msra.mxu0 0.0
    %227 = vmatprep.subr.mxu0 0.0
    %228 = vmatpush1.msra.mxu0 0.0
    %229 = vmatprep.subr.mxu0 0.0
    %230 = vmatpush1.msra.mxu0 0.0
    %231 = vmatprep.subr.mxu0 0.0
    %232 = vmatpush1.msra.mxu0 0.0
    %233 = vmatprep.subr.mxu0 0.0
    %234 = vmatpush1.msra.mxu0 0.0
    %235 = vmatprep.subr.mxu0 0.0
    %236 = vmatpush1.msra.mxu0 0.0
    %237 = vmatprep.subr.mxu0 0.0
    %238 = vmatpush1.msra.mxu0 0.0
    %239 = vmatprep.subr.mxu0 0.0
    %240 = vmatpush1.msra.mxu0 0.0
    %241 = vmatprep.subr.mxu0 0.0
    %242 = vmatpush1.msra.mxu0 0.0
    %243 = vmatprep.subr.mxu0 0.0
    %244 = vmatpush1.msra.mxu0 0.0
    %245 = vmatprep.subr.mxu0 0.0
    %246 = vmatpush1.msra.mxu0 0.0
    %247 = vmatprep.subr.mxu0 0.0
    %248 = vmatpush1.msra.mxu0 0.0
    %249 = vmatprep.subr.mxu0 0.0
    %250 = vmatpush1.msra.mxu0 0.0
    %251 = vmatprep.subr.mxu0 0.0
    %252 = vmatpush1.msra.mxu0 0.0
    %253 = vmatprep.subr.mxu0 0.0
    %254 = vmatpush1.msra.mxu0 0.0
    %255 = vmatprep.subr.mxu0 0.0
    %256 = vmatpush1.msra.mxu0 0.0
    %257 = vmatprep.subr.mxu0 0.0
    %258 = vmatpush1.msra.mxu0 0.0
    %259 = vmatprep.subr.mxu0 0.0
    %260 = vmatpush1.msra.mxu0 0.0
    %261 = vmatprep.subr.mxu0 0.0
    %262 = vmatpush1.msra.mxu0 0.0
    %263 = vmatprep.subr.mxu0 0.0
    %264 = vmatpush1.msra.mxu0 0.0
    %265 = vmatprep.subr.mxu0 0.0
    %266 = vmatpush1.msra.mxu0 0.0
    %267 = vmatprep.subr.mxu0 0.0
    %268 = vmatpush1.msra.mxu0 0.0
    %269 = vmatprep.subr.mxu0 0.0
    %270 = vmatpush1.msra.mxu0 0.0
    %271 = vmatprep.subr.mxu0 0.0
    %272 = vmatpush1.msra.mxu0 0.0
    %273 = vmatprep.subr.mxu0 0.0
    %274 = vmatpush1.msra.mxu0 0.0
    %275 = vmatprep.subr.mxu0 0.0
    %276 = vmatpush1.msra.mxu0 0.0
    %277 = vmatprep.subr.mxu0 0.0
    %278 = vmatpush1.msra.mxu0 0.0
    %279 = vmatprep.subr.mxu0 0.0
    %280 = vmatpush1.msra.mxu0 0.0
    %281 = vmatprep.mubr.f32.mxu0 0.0
    %282 = vmatmul.mubr.f32.gmra.mrb[0].mxu0 %v215
    %v283 = vpop.f32.mrb[0].mxu0
    %v284 = vadd.f32 %v212, %v283
    %v285 = vpop.f32.mrb[0].mxu0
    %286 = vdwg.mxu0
    %vm287 = vcmask 123904
    %288 = vst.msk [vmem:[#allocation2] sm:$0x3] %vm287, %v284
    // Predicated region
    $region30: #{metadata_forward.1} parent=1 // pred_check
      _
    $region31: #{metadata_forward.1} parent=1 // pred_check_branch
      %290 = sbr.rel (0) target = $region33
    $region32: #{metadata_forward.1} parent=1 // pred_region
      %s292 = ssub.s32 32, 32
      %293 = vsyncadd [#allocation3], %s292
      %s295 = sshll.u32 [#allocation2], 4
      %s296 = int_to_ptr.vmem [resolvable:$true] %s295
      %298 = dma.vmem_to_hbm [thread:$0]  %s296, 32, %s7, [#allocation3]
    $region33: #{metadata_forward.1} parent=1 // pred_fallthru
      _
    // Predicated region
    $region34: #{metadata_forward.1} parent=1 // pred_check
      _
    $region35: #{metadata_forward.1} parent=1 // pred_check_branch
      %300 = sbr.rel (0) target = $region37
    $region36: #{metadata_forward.1} parent=1 // pred_region
      %301 = dma.done [#allocation3], 32
    $region37: #{metadata_forward.1} parent=1 // pred_fallthru
      _
    %302 = vsyncpa [#allocation3], 1

</llo_original>
